<compile_context>
chip_gen: v6e
topology: v6e:2x2x1
jax: 0.10.0
libtpu: 0.0.40
codegen_flags: <defaults>
</compile_context>

<pallas_src>
import jax
import jax.numpy as jnp
from jax.experimental import pallas as pl
from jax.experimental.pallas import tpu as pltpu

BATCH = 2
SEQ_LEN = 128        # multiple of 128 -> lane-dense scores / softmax / store
ENCODER_DIM = 32
DECODER_DIM = 16
ATTENTION_DIM = 64


# ---------------------------------------------------------------------------
# Fused attention kernel: whole batch in one invocation, all tiles in VMEM.
# ---------------------------------------------------------------------------
def _attention_kernel(enc_ref, hid_ref, uw_ref, ub_ref, ww_ref, wb_ref,
                      aw_ref, ab_ref, out_ref):
    B, L = out_ref.shape
    A = uw_ref.shape[0]

    # u_hs^T = uw^T @ enc^T : (A, B*L).  Single MXU matmul, N = B*L lane-dense.
    u = jnp.dot(uw_ref[...], enc_ref[...], preferred_element_type=jnp.float32)

    # w_ah^T with both (A,1) biases folded in : (A, B)
    wa = (jnp.dot(ww_ref[...], hid_ref[...], preferred_element_type=jnp.float32)
          + wb_ref[...] + ub_ref[...])

    # Broadcast each batch's (A, 1) column across its L lanes -> (A, B*L).
    wa_full = jnp.concatenate(
        [jnp.broadcast_to(wa[:, b:b + 1], (A, L)) for b in range(B)], axis=1)

    # tanh on the lane-dense (A, B*L) tile (EUP; VPU add).
    combined = jnp.tanh(u + wa_full)

    # scores^T = aw @ combined : (1, B*L).  Plain (1,A)x(A,B*L) MXU matmul,
    # no transposed RHS, so the row stays lane-dense for softmax + store.
    scores = jnp.dot(aw_ref[...], combined,
                     preferred_element_type=jnp.float32) + ab_ref[0]

    # Per-batch softmax over the sequence (lane) axis.  B is tiny -> unrolled.
    for b in range(B):
        s_b = scores[:, b * L:(b + 1) * L]                       # (1, L)
        m = jnp.max(s_b, axis=-1, keepdims=True)
        e = jnp.exp(s_b - m)
        denom = jnp.sum(e, axis=-1, keepdims=True)
        r = pl.reciprocal(denom, approx=True)                    # EUP slot
        r = r * (2.0 - denom * r)                                # 1 Newton step -> ~f32 exact
        out_ref[pl.ds(b, 1), :] = (e * r).astype(out_ref.dtype)


def attention_pallas(encoder_outputs, hidden, params):
    """encoder_outputs: (B, L, E) f32, hidden: (B, D) f32 -> alphas (B, L) f32."""
    B, L, E = encoder_outputs.shape
    D = hidden.shape[1]
    A = params["u_w"].shape[1]

    # Layout plumbing in the wrapper (XLA): attention_dim -> sublanes,
    # fused batch*seq -> the 128-lane axis.
    enc_t = jnp.transpose(encoder_outputs, (2, 0, 1)).reshape(E, B * L)  # (E, B*L)
    hid_t = hidden.T                                                     # (D, B)
    uw_t = params["u_w"].T                                               # (A, E)
    ww_t = params["w_w"].T                                               # (A, D)
    ub_t = params["u_b"].reshape(A, 1)                                   # (A, 1)
    wb_t = params["w_b"].reshape(A, 1)                                   # (A, 1)
    aw = params["a_w"]                                                   # (1, A)
    ab = params["a_b"].reshape(1)                                        # (1,) scalar

    vmem = pl.BlockSpec(memory_space=pltpu.MemorySpace.VMEM)
    smem = pl.BlockSpec(memory_space=pltpu.MemorySpace.SMEM)

    return pl.pallas_call(
        _attention_kernel,
        out_shape=jax.ShapeDtypeStruct((B, L), jnp.float32),
        in_specs=[vmem, vmem, vmem, vmem, vmem, vmem, vmem, smem],
        out_specs=vmem,
    )(enc_t, hid_t, uw_t, ub_t, ww_t, wb_t, aw, ab)


# ---------------------------------------------------------------------------
# Pure-JAX reference (mirrors the PyTorch forward exactly)
# ---------------------------------------------------------------------------
def attention_reference(encoder_outputs, hidden, params):
    u_hs = encoder_outputs @ params["u_w"] + params["u_b"]           # (B, L, A)
    w_ah = hidden @ params["w_w"] + params["w_b"]                    # (B, A)
    combined = jnp.tanh(u_hs + w_ah[:, None, :])                     # (B, L, A)
    scores = (jnp.einsum("bla,xa->blx", combined, params["a_w"])[..., 0]
              + params["a_b"][0, 0])                                 # (B, L)
    return jax.nn.softmax(scores, axis=1)


if __name__ == "__main__":
    key = jax.random.PRNGKey(0)
    k_enc, k_hid, k_uw, k_ub, k_ww, k_wb, k_aw, k_ab = jax.random.split(key, 8)

    encoder_outputs = jax.random.normal(
        k_enc, (BATCH, SEQ_LEN, ENCODER_DIM), jnp.float32)
    hidden = jax.random.normal(k_hid, (BATCH, DECODER_DIM), jnp.float32)

    params = {
        # Linear weights stored transposed as (in, out) so reference does x @ W.
        "u_w": 0.1 * jax.random.normal(k_uw, (ENCODER_DIM, ATTENTION_DIM), jnp.float32),
        "u_b": 0.1 * jax.random.normal(k_ub, (1, ATTENTION_DIM), jnp.float32),
        "w_w": 0.1 * jax.random.normal(k_ww, (DECODER_DIM, ATTENTION_DIM), jnp.float32),
        "w_b": 0.1 * jax.random.normal(k_wb, (1, ATTENTION_DIM), jnp.float32),
        # A: Linear(attention_dim, 1): weight kept in PyTorch (out, in) = (1, A) layout.
        "a_w": 0.1 * jax.random.normal(k_aw, (1, ATTENTION_DIM), jnp.float32),
        "a_b": 0.1 * jax.random.normal(k_ab, (1, 1), jnp.float32),
    }

    alphas = jax.jit(attention_pallas)(encoder_outputs, hidden, params)
    jax.block_until_ready(alphas)

    ref = attention_reference(encoder_outputs, hidden, params)
    assert alphas.shape == (BATCH, SEQ_LEN)
    assert jnp.allclose(jnp.sum(alphas, axis=1), 1.0, atol=1e-5)
    assert jnp.allclose(alphas, ref, atol=1e-5, rtol=1e-5)

    print("KERNEL_OK")
</pallas_src>

<mosaic_0001>
module attributes {stable_mosaic.version = 11 : i64} {
  func.func @_attention_kernel(%arg0: memref<32x256xf32, #tpu.memory_space<vmem>>, %arg1: memref<16x2xf32, #tpu.memory_space<vmem>>, %arg2: memref<64x32xf32, #tpu.memory_space<vmem>>, %arg3: memref<64x1xf32, #tpu.memory_space<vmem>>, %arg4: memref<64x16xf32, #tpu.memory_space<vmem>>, %arg5: memref<64x1xf32, #tpu.memory_space<vmem>>, %arg6: memref<1x64xf32, #tpu.memory_space<vmem>>, %arg7: memref<1xf32, #tpu.memory_space<smem>>, %arg8: memref<2x128xf32, #tpu.memory_space<vmem>>) attributes {dimension_semantics = [], scalar_prefetch = 0 : i64, scratch_operands = 0 : i64, tpu.core_type = #tpu.core_type<tc>} {
    %c0 = arith.constant 0 : index
    %c0_0 = arith.constant 0 : index
    %0 = vector.load %arg2[%c0, %c0_0] : memref<64x32xf32, #tpu.memory_space<vmem>>, vector<64x32xf32>
    %c0_1 = arith.constant 0 : index
    %c0_2 = arith.constant 0 : index
    %1 = vector.load %arg0[%c0_1, %c0_2] : memref<32x256xf32, #tpu.memory_space<vmem>>, vector<32x256xf32>
    %cst = arith.constant dense<0.000000e+00> : vector<64x256xf32>
    %2 = tpu.matmul %0, %1, %cst {dimension_numbers = #tpu.dot_dimension_numbers<[1], [0], [0], [1], [0, 0, 1, 1], [], []>} : vector<64x32xf32>, vector<32x256xf32>, vector<64x256xf32> -> vector<64x256xf32>
    %c0_3 = arith.constant 0 : index
    %c0_4 = arith.constant 0 : index
    %3 = vector.load %arg4[%c0_3, %c0_4] : memref<64x16xf32, #tpu.memory_space<vmem>>, vector<64x16xf32>
    %c0_5 = arith.constant 0 : index
    %c0_6 = arith.constant 0 : index
    %4 = vector.load %arg1[%c0_5, %c0_6] : memref<16x2xf32, #tpu.memory_space<vmem>>, vector<16x2xf32>
    %cst_7 = arith.constant dense<0.000000e+00> : vector<64x2xf32>
    %5 = tpu.matmul %3, %4, %cst_7 {dimension_numbers = #tpu.dot_dimension_numbers<[1], [0], [0], [1], [0, 0, 1, 1], [], []>} : vector<64x16xf32>, vector<16x2xf32>, vector<64x2xf32> -> vector<64x2xf32>
    %c0_8 = arith.constant 0 : index
    %c0_9 = arith.constant 0 : index
    %6 = vector.load %arg5[%c0_8, %c0_9] : memref<64x1xf32, #tpu.memory_space<vmem>>, vector<64x1xf32>
    %7 = vector.broadcast %6 : vector<64x1xf32> to vector<64x2xf32>
    %8 = arith.addf %5, %7 : vector<64x2xf32>
    %c0_10 = arith.constant 0 : index
    %c0_11 = arith.constant 0 : index
    %9 = vector.load %arg3[%c0_10, %c0_11] : memref<64x1xf32, #tpu.memory_space<vmem>>, vector<64x1xf32>
    %10 = vector.broadcast %9 : vector<64x1xf32> to vector<64x2xf32>
    %11 = arith.addf %8, %10 : vector<64x2xf32>
    %12 = vector.extract_strided_slice %11 {offsets = [0, 0], sizes = [64, 1], strides = [1, 1]} : vector<64x2xf32> to vector<64x1xf32>
    %13 = vector.shape_cast %12 : vector<64x1xf32> to vector<64x1xf32>
    %14 = vector.broadcast %13 : vector<64x1xf32> to vector<64x128xf32>
    %15 = vector.extract_strided_slice %11 {offsets = [0, 1], sizes = [64, 1], strides = [1, 1]} : vector<64x2xf32> to vector<64x1xf32>
    %16 = vector.shape_cast %15 : vector<64x1xf32> to vector<64x1xf32>
    %17 = vector.broadcast %16 : vector<64x1xf32> to vector<64x128xf32>
    %18 = tpu.concatenate %14, %17 in 1 : vector<64x128xf32>, vector<64x128xf32> -> vector<64x256xf32>
    %19 = arith.addf %2, %18 : vector<64x256xf32>
    %20 = math.tanh %19 : vector<64x256xf32>
    %c0_12 = arith.constant 0 : index
    %c0_13 = arith.constant 0 : index
    %21 = vector.load %arg6[%c0_12, %c0_13] : memref<1x64xf32, #tpu.memory_space<vmem>>, vector<1x64xf32>
    %cst_14 = arith.constant dense<0.000000e+00> : vector<1x256xf32>
    %22 = tpu.matmul %21, %20, %cst_14 {dimension_numbers = #tpu.dot_dimension_numbers<[1], [0], [0], [1], [0, 0, 1, 1], [], []>} : vector<1x64xf32>, vector<64x256xf32>, vector<1x256xf32> -> vector<1x256xf32>
    %c0_15 = arith.constant 0 : index
    %23 = memref.load %arg7[%c0_15] : memref<1xf32, #tpu.memory_space<smem>>
    %24 = vector.broadcast %23 : f32 to vector<1x256xf32>
    %25 = arith.addf %22, %24 : vector<1x256xf32>
    %26 = vector.extract_strided_slice %25 {offsets = [0, 0], sizes = [1, 128], strides = [1, 1]} : vector<1x256xf32> to vector<1x128xf32>
    %cst_16 = arith.constant dense<0xFF800000> : vector<1xf32>
    %27 = vector.multi_reduction <maximumf>, %26, %cst_16 [1] : vector<1x128xf32> to vector<1xf32>
    %28 = vector.shape_cast %27 : vector<1xf32> to vector<1x1xf32>
    %29 = vector.broadcast %28 : vector<1x1xf32> to vector<1x128xf32>
    %30 = arith.subf %26, %29 : vector<1x128xf32>
    %31 = math.exp %30 : vector<1x128xf32>
    %cst_17 = arith.constant dense<0.000000e+00> : vector<1xf32>
    %32 = vector.multi_reduction <add>, %31, %cst_17 [1] : vector<1x128xf32> to vector<1xf32>
    %33 = vector.shape_cast %32 : vector<1xf32> to vector<1x1xf32>
    %34 = tpu.reciprocal %33 {approx = true} : vector<1x1xf32> -> vector<1x1xf32>
    %35 = arith.mulf %33, %34 : vector<1x1xf32>
    %cst_18 = arith.constant 2.000000e+00 : f32
    %36 = vector.broadcast %cst_18 : f32 to vector<1x1xf32>
    %37 = arith.subf %36, %35 : vector<1x1xf32>
    %38 = arith.mulf %34, %37 : vector<1x1xf32>
    %39 = vector.broadcast %38 : vector<1x1xf32> to vector<1x128xf32>
    %40 = arith.mulf %31, %39 : vector<1x128xf32>
    %c0_19 = arith.constant 0 : index
    %c0_20 = arith.constant 0 : index
    %41 = vector.load %arg8[%c0_19, %c0_20] : memref<2x128xf32, #tpu.memory_space<vmem>>, vector<1x128xf32>
    tpu.vector_store %arg8[%c0_19, %c0_20], %40 {strides = array<i32>} : memref<2x128xf32, #tpu.memory_space<vmem>>, vector<1x128xf32>,
    %42 = vector.extract_strided_slice %25 {offsets = [0, 128], sizes = [1, 128], strides = [1, 1]} : vector<1x256xf32> to vector<1x128xf32>
    %cst_21 = arith.constant dense<0xFF800000> : vector<1xf32>
    %43 = vector.multi_reduction <maximumf>, %42, %cst_21 [1] : vector<1x128xf32> to vector<1xf32>
    %44 = vector.shape_cast %43 : vector<1xf32> to vector<1x1xf32>
    %45 = vector.broadcast %44 : vector<1x1xf32> to vector<1x128xf32>
    %46 = arith.subf %42, %45 : vector<1x128xf32>
    %47 = math.exp %46 : vector<1x128xf32>
    %cst_22 = arith.constant dense<0.000000e+00> : vector<1xf32>
    %48 = vector.multi_reduction <add>, %47, %cst_22 [1] : vector<1x128xf32> to vector<1xf32>
    %49 = vector.shape_cast %48 : vector<1xf32> to vector<1x1xf32>
    %50 = tpu.reciprocal %49 {approx = true} : vector<1x1xf32> -> vector<1x1xf32>
    %51 = arith.mulf %49, %50 : vector<1x1xf32>
    %cst_23 = arith.constant 2.000000e+00 : f32
    %52 = vector.broadcast %cst_23 : f32 to vector<1x1xf32>
    %53 = arith.subf %52, %51 : vector<1x1xf32>
    %54 = arith.mulf %50, %53 : vector<1x1xf32>
    %55 = vector.broadcast %54 : vector<1x1xf32> to vector<1x128xf32>
    %56 = arith.mulf %47, %55 : vector<1x128xf32>
    %c1 = arith.constant 1 : index
    %c0_24 = arith.constant 0 : index
    %57 = vector.load %arg8[%c1, %c0_24] : memref<2x128xf32, #tpu.memory_space<vmem>>, vector<1x128xf32>
    tpu.vector_store %arg8[%c1, %c0_24], %56 {strides = array<i32>} : memref<2x128xf32, #tpu.memory_space<vmem>>, vector<1x128xf32>,
    return
  }
}

</mosaic_0001>

<llo_original>
// kernel: attention_pallas.1
$region0: #{attention_pallas.1}
  #allocation0 [shape = 'u32[]', space=smem, size = 0x4, offset = 0x4, fixed_abs, tag = 'smem constant byte address 0x4 - core index']
  #allocation1 [shape = 'u32[144,128]{1,0:T(1,128)}', space=vmem, size = 0x12000, scoped, tag = 'internal scratch']
  #allocation2 [shape = 'f32[1]{0:T(128)S(6)}', space=smem, size = 0x200, scoped, tag = 'scoped memory for attention_pallas.1']
  %s0 = inlined_call_operand.vmem [shape: f32[32,256], index: 0, kind: input, shape index: {}]
  %s1 = inlined_call_operand.vmem [shape: f32[16,2], index: 1, kind: input, shape index: {}]
  %s2 = inlined_call_operand.vmem [shape: f32[64,32], index: 2, kind: input, shape index: {}]
  %s3 = inlined_call_operand.vmem [shape: f32[64,1], index: 3, kind: input, shape index: {}]
  %s4 = inlined_call_operand.vmem [shape: f32[64,16], index: 4, kind: input, shape index: {}]
  %s5 = inlined_call_operand.vmem [shape: f32[64,1], index: 5, kind: input, shape index: {}]
  %s6 = inlined_call_operand.vmem [shape: f32[1,64], index: 6, kind: input, shape index: {}]
  %s7 = inlined_call_operand.<no memory space> [shape: f32[1], index: 7, kind: input, shape index: {}]
  %s8 = inlined_call_operand.hbm [shape: f32[2,128], index: 8, kind: output, shape index: {}]
  %s9 = sld [smem:[#allocation0]]
  $region42: #{attention_pallas.1} parent=0
    _
  %s11 = ssub.s32 1, %s9
  %s12 = scalar_select 0, %s11, %s9
  %13 = sst [smem:[#allocation2]] %s7
  $region1: #{attention_pallas.1} parent=0
    #allocation3 [shape = 'u8[1024]{0}', space=vmem, size = 0x400, scoped, tag = 'output window, operand 0, single buffered']
    #allocation4 [shape = 's32[1]{0}', space=sflag, size = 0x4, scoped, tag = 'scoped memory for attention_pallas.1']
    %14 = vsyncpa [#allocation4], 0
    // Predicated region
    $region2: #{attention_pallas.1} parent=1 // pred_check
      _
    $region3: #{attention_pallas.1} parent=1 // pred_check_branch
      %16 = sbr.rel (0) target = $region5
    $region4: #{attention_pallas.1} parent=1 // pred_region
      _
    $region5: #{attention_pallas.1} parent=1 // pred_fallthru
      _
    // Predicated region
    $region6: #{attention_pallas.1} parent=1 // pred_check
      _
    $region7: #{attention_pallas.1} parent=1 // pred_check_branch
      %18 = sbr.rel (0) target = $region9
    $region8: #{attention_pallas.1} parent=1 // pred_region
      _
    $region9: #{attention_pallas.1} parent=1 // pred_fallthru
      _
    // Predicated region
    $region10: #{attention_pallas.1} parent=1 // pred_check
      _
    $region11: #{attention_pallas.1} parent=1 // pred_check_branch
      %20 = sbr.rel (0) target = $region13
    $region12: #{attention_pallas.1} parent=1 // pred_region
      _
    $region13: #{attention_pallas.1} parent=1 // pred_fallthru
      _
    // Predicated region
    $region14: #{attention_pallas.1} parent=1 // pred_check
      _
    $region15: #{attention_pallas.1} parent=1 // pred_check_branch
      %22 = sbr.rel (0) target = $region17
    $region16: #{attention_pallas.1} parent=1 // pred_region
      _
    $region17: #{attention_pallas.1} parent=1 // pred_fallthru
      _
    // Predicated region
    $region18: #{attention_pallas.1} parent=1 // pred_check
      _
    $region19: #{attention_pallas.1} parent=1 // pred_check_branch
      %24 = sbr.rel (0) target = $region21
    $region20: #{attention_pallas.1} parent=1 // pred_region
      _
    $region21: #{attention_pallas.1} parent=1 // pred_fallthru
      _
    // Predicated region
    $region22: #{attention_pallas.1} parent=1 // pred_check
      _
    $region23: #{attention_pallas.1} parent=1 // pred_check_branch
      %26 = sbr.rel (0) target = $region25
    $region24: #{attention_pallas.1} parent=1 // pred_region
      _
    $region25: #{attention_pallas.1} parent=1 // pred_fallthru
      _
    // Predicated region
    $region26: #{attention_pallas.1} parent=1 // pred_check
      _
    $region27: #{attention_pallas.1} parent=1 // pred_check_branch
      %28 = sbr.rel (0) target = $region29
    $region28: #{attention_pallas.1} parent=1 // pred_region
      _
    $region29: #{attention_pallas.1} parent=1 // pred_fallthru
      _
    // Predicated region
    $region30: #{attention_pallas.1} parent=1 // pred_check
      _
    $region31: #{attention_pallas.1} parent=1 // pred_check_branch
      %30 = sbr.rel (0) target = $region33
    $region32: #{attention_pallas.1} parent=1 // pred_region
      _
    $region33: #{attention_pallas.1} parent=1 // pred_fallthru
      _
    %v31 = vld [vmem:[%s2] sm:$0xff]
    %v32 = vld [vmem:[%s2 + $0x8] sm:$0xff]
    %v33 = vld [vmem:[%s2 + $0x10] sm:$0xff]
    %v34 = vld [vmem:[%s2 + $0x18] sm:$0xff]
    %v35 = vld [vmem:[%s2 + $0x20] sm:$0xff]
    %v36 = vld [vmem:[%s2 + $0x28] sm:$0xff]
    %v37 = vld [vmem:[%s2 + $0x30] sm:$0xff]
    %v38 = vld [vmem:[%s2 + $0x38] sm:$0xff]
    %v39 = vld [vmem:[%s0] sm:$0xff]
    %v40 = vld [vmem:[%s0 + $0x8] sm:$0xff]
    %v41 = vld [vmem:[%s0 + $0x10] sm:$0xff]
    %v42 = vld [vmem:[%s0 + $0x18] sm:$0xff]
    %v43 = vld [vmem:[%s0 + $0x20] sm:$0xff]
    %v44 = vld [vmem:[%s0 + $0x28] sm:$0xff]
    %v45 = vld [vmem:[%s0 + $0x30] sm:$0xff]
    %v46 = vld [vmem:[%s0 + $0x38] sm:$0xff]
    %v47 = vld [vmem:[%s4] sm:$0xff]
    %v48 = vld [vmem:[%s4 + $0x8] sm:$0xff]
    %v49 = vld [vmem:[%s4 + $0x10] sm:$0xff]
    %v50 = vld [vmem:[%s4 + $0x18] sm:$0xff]
    %v51 = vld [vmem:[%s4 + $0x20] sm:$0xff]
    %v52 = vld [vmem:[%s4 + $0x28] sm:$0xff]
    %v53 = vld [vmem:[%s4 + $0x30] sm:$0xff]
    %v54 = vld [vmem:[%s4 + $0x38] sm:$0xff]
    %v55 = vld [vmem:[%s1] sm:$0xff]
    %v56 = vld [vmem:[%s1 + $0x8] sm:$0xff]
    %v57 = vld [vmem:[%s5] sm:$0xff]
    %v58 = vld [vmem:[%s5 + $0x8] sm:$0xff]
    %v59 = vld [vmem:[%s5 + $0x10] sm:$0xff]
    %v60 = vld [vmem:[%s5 + $0x18] sm:$0xff]
    %v61 = vld [vmem:[%s5 + $0x20] sm:$0xff]
    %v62 = vld [vmem:[%s5 + $0x28] sm:$0xff]
    %v63 = vld [vmem:[%s5 + $0x30] sm:$0xff]
    %v64 = vld [vmem:[%s5 + $0x38] sm:$0xff]
    %66 = vset.pattern.permute.xlu0 0
    %67 = vperm.xlu0 %66, %v57
    %v68 = vpop.permute.xlu0 %67
    %71 = vset.pattern.permute.xlu0 0
    %72 = vperm.xlu0 %71, %v58
    %v73 = vpop.permute.xlu0 %72
    %76 = vset.pattern.permute.xlu0 0
    %77 = vperm.xlu0 %76, %v59
    %v78 = vpop.permute.xlu0 %77
    %81 = vset.pattern.permute.xlu0 0
    %82 = vperm.xlu0 %81, %v60
    %v83 = vpop.permute.xlu0 %82
    %86 = vset.pattern.permute.xlu0 0
    %87 = vperm.xlu0 %86, %v61
    %v88 = vpop.permute.xlu0 %87
    %91 = vset.pattern.permute.xlu0 0
    %92 = vperm.xlu0 %91, %v62
    %v93 = vpop.permute.xlu0 %92
    %96 = vset.pattern.permute.xlu0 0
    %97 = vperm.xlu0 %96, %v63
    %v98 = vpop.permute.xlu0 %97
    %101 = vset.pattern.permute.xlu0 0
    %102 = vperm.xlu0 %101, %v64
    %v103 = vpop.permute.xlu0 %102
    %vm105 = vcmask 130048
    %v107 = vsel %vm105, %v47, 0
    %v110 = vsel %vm105, %v48, 0
    %v113 = vsel %vm105, %v49, 0
    %v116 = vsel %vm105, %v50, 0
    %v119 = vsel %vm105, %v51, 0
    %v122 = vsel %vm105, %v52, 0
    %v125 = vsel %vm105, %v53, 0
    %v128 = vsel %vm105, %v54, 0
    %130 = vmatprep.subr.mxu0 0.0
    %131 = vmatpush1.msra.mxu0 0.0
    %132 = vmatprep.subr.mxu0 0.0
    %133 = vmatpush1.msra.mxu0 0.0
    %134 = vmatprep.subr.mxu0 0.0
    %135 = vmatpush1.msra.mxu0 0.0
    %136 = vmatprep.subr.mxu0 0.0
    %137 = vmatpush1.msra.mxu0 0.0
    %138 = vmatprep.subr.mxu0 0.0
    %139 = vmatpush1.msra.mxu0 0.0
    %140 = vmatprep.subr.mxu0 0.0
    %141 = vmatpush1.msra.mxu0 0.0
    %142 = vmatprep.subr.mxu0 0.0
    %143 = vmatpush1.msra.mxu0 0.0
    %144 = vmatprep.subr.mxu0 0.0
    %145 = vmatpush1.msra.mxu0 0.0
    %146 = vmatprep.subr.mxu0 0.0
    %147 = vmatpush1.msra.mxu0 0.0
    %148 = vmatprep.subr.mxu0 0.0
    %149 = vmatpush1.msra.mxu0 0.0
    %150 = vmatprep.subr.mxu0 0.0
    %151 = vmatpush1.msra.mxu0 0.0
    %152 = vmatprep.subr.mxu0 0.0
    %153 = vmatpush1.msra.mxu0 0.0
    %154 = vmatprep.subr.mxu0 0.0
    %155 = vmatpush1.msra.mxu0 0.0
    %156 = vmatprep.subr.mxu0 0.0
    %157 = vmatpush1.msra.mxu0 0.0
    %158 = vmatprep.subr.mxu0 0.0
    %159 = vmatpush1.msra.mxu0 %v56
    %160 = vmatprep.subr.mxu0 0.0
    %161 = vmatpush1.msra.mxu0 %v55
    %162 = vmatprep.subr.mxu0 0.0
    %163 = vmatpush2.msra.mxu0 0.0
    %164 = vmatprep.subr.mxu0 0.0
    %165 = vmatpush2.msra.mxu0 0.0
    %166 = vmatprep.subr.mxu0 0.0
    %167 = vmatpush2.msra.mxu0 0.0
    %168 = vmatprep.subr.mxu0 0.0
    %169 = vmatpush2.msra.mxu0 0.0
    %170 = vmatprep.subr.mxu0 0.0
    %171 = vmatpush2.msra.mxu0 0.0
    %172 = vmatprep.subr.mxu0 0.0
    %173 = vmatpush2.msra.mxu0 0.0
    %174 = vmatprep.subr.mxu0 0.0
    %175 = vmatpush2.msra.mxu0 0.0
    %176 = vmatprep.subr.mxu0 0.0
    %177 = vmatpush2.msra.mxu0 0.0
    %178 = vmatprep.subr.mxu0 0.0
    %179 = vmatpush2.msra.mxu0 0.0
    %180 = vmatprep.subr.mxu0 0.0
    %181 = vmatpush2.msra.mxu0 0.0
    %182 = vmatprep.subr.mxu0 0.0
    %183 = vmatpush2.msra.mxu0 0.0
    %184 = vmatprep.subr.mxu0 0.0
    %185 = vmatpush2.msra.mxu0 0.0
    %186 = vmatprep.subr.mxu0 0.0
    %187 = vmatpush2.msra.mxu0 0.0
    %188 = vmatprep.subr.mxu0 0.0
    %189 = vmatpush2.msra.mxu0 0.0
    %190 = vmatprep.subr.mxu0 0.0
    %191 = vmatpush2.msra.mxu0 0.0
    %192 = vmatprep.subr.mxu0 0.0
    %193 = vmatpush2.msra.mxu0 0.0
    %194 = vmatprep.mubr.f32.mxu0 0.0
    %195 = vmatmul.mubr.f32.gmra.mxu0 %v107
    %v196 = vpop.f32.mrf.mxu0
    %v197 = vadd.f32 %v68, %v196
    %v198 = vpop.f32.mrf.mxu0
    %199 = vmatprep.mubr.f32.mxu0 0.0
    %200 = vmatmul.mubr.f32.gmra.mxu0 %v110
    %v201 = vpop.f32.mrf.mxu0
    %v202 = vadd.f32 %v73, %v201
    %v203 = vpop.f32.mrf.mxu0
    %204 = vmatprep.mubr.f32.mxu0 0.0
    %205 = vmatmul.mubr.f32.gmra.mxu0 %v113
    %v206 = vpop.f32.mrf.mxu0
    %v207 = vadd.f32 %v78, %v206
    %v208 = vpop.f32.mrf.mxu0
    %209 = vmatprep.mubr.f32.mxu0 0.0
    %210 = vmatmul.mubr.f32.gmra.mxu0 %v116
    %v211 = vpop.f32.mrf.mxu0
    %v212 = vadd.f32 %v83, %v211
    %v213 = vpop.f32.mrf.mxu0
    %214 = vmatprep.mubr.f32.mxu0 0.0
    %215 = vmatmul.mubr.f32.gmra.mxu0 %v119
    %v216 = vpop.f32.mrf.mxu0
    %v217 = vadd.f32 %v88, %v216
    %v218 = vpop.f32.mrf.mxu0
    %219 = vmatprep.mubr.f32.mxu0 0.0
    %220 = vmatmul.mubr.f32.gmra.mxu0 %v122
    %v221 = vpop.f32.mrf.mxu0
    %v222 = vadd.f32 %v93, %v221
    %v223 = vpop.f32.mrf.mxu0
    %224 = vmatprep.mubr.f32.mxu0 0.0
    %225 = vmatmul.mubr.f32.gmra.mxu0 %v125
    %v226 = vpop.f32.mrf.mxu0
    %v227 = vadd.f32 %v98, %v226
    %v228 = vpop.f32.mrf.mxu0
    %229 = vmatprep.mubr.f32.mxu0 0.0
    %230 = vmatmul.mubr.f32.gmra.mxu0 %v128
    %v231 = vpop.f32.mrf.mxu0
    %v232 = vadd.f32 %v103, %v231
    %v233 = vpop.f32.mrf.mxu0
    %234 = vdwg.mxu0
    %v235 = vld [vmem:[%s3] sm:$0xff]
    %v236 = vld [vmem:[%s3 + $0x8] sm:$0xff]
    %v237 = vld [vmem:[%s3 + $0x10] sm:$0xff]
    %v238 = vld [vmem:[%s3 + $0x18] sm:$0xff]
    %v239 = vld [vmem:[%s3 + $0x20] sm:$0xff]
    %v240 = vld [vmem:[%s3 + $0x28] sm:$0xff]
    %v241 = vld [vmem:[%s3 + $0x30] sm:$0xff]
    %v242 = vld [vmem:[%s3 + $0x38] sm:$0xff]
    %244 = vset.pattern.permute.xlu0 0
    %245 = vperm.xlu0 %244, %v235
    %v246 = vpop.permute.xlu0 %245
    %249 = vset.pattern.permute.xlu0 0
    %250 = vperm.xlu0 %249, %v236
    %v251 = vpop.permute.xlu0 %250
    %254 = vset.pattern.permute.xlu0 0
    %255 = vperm.xlu0 %254, %v237
    %v256 = vpop.permute.xlu0 %255
    %259 = vset.pattern.permute.xlu0 0
    %260 = vperm.xlu0 %259, %v238
    %v261 = vpop.permute.xlu0 %260
    %264 = vset.pattern.permute.xlu0 0
    %265 = vperm.xlu0 %264, %v239
    %v266 = vpop.permute.xlu0 %265
    %269 = vset.pattern.permute.xlu0 0
    %270 = vperm.xlu0 %269, %v240
    %v271 = vpop.permute.xlu0 %270
    %274 = vset.pattern.permute.xlu0 0
    %275 = vperm.xlu0 %274, %v241
    %v276 = vpop.permute.xlu0 %275
    %279 = vset.pattern.permute.xlu0 0
    %280 = vperm.xlu0 %279, %v242
    %v281 = vpop.permute.xlu0 %280
    %v283 = vadd.f32 %v197, %v246
    %v284 = vadd.f32 %v202, %v251
    %v285 = vadd.f32 %v207, %v256
    %v286 = vadd.f32 %v212, %v261
    %v287 = vadd.f32 %v217, %v266
    %v288 = vadd.f32 %v222, %v271
    %v289 = vadd.f32 %v227, %v276
    %v290 = vadd.f32 %v232, %v281
    %292 = vset.pattern.permute.xlu0 0
    %293 = vperm.xlu0 %292, %v283
    %v294 = vpop.permute.xlu0 %293
    %297 = vset.pattern.permute.xlu0 0
    %298 = vperm.xlu0 %297, %v284
    %v299 = vpop.permute.xlu0 %298
    %302 = vset.pattern.permute.xlu0 0
    %303 = vperm.xlu0 %302, %v285
    %v304 = vpop.permute.xlu0 %303
    %307 = vset.pattern.permute.xlu0 0
    %308 = vperm.xlu0 %307, %v286
    %v309 = vpop.permute.xlu0 %308
    %312 = vset.pattern.permute.xlu0 0
    %313 = vperm.xlu0 %312, %v287
    %v314 = vpop.permute.xlu0 %313
    %317 = vset.pattern.permute.xlu0 0
    %318 = vperm.xlu0 %317, %v288
    %v319 = vpop.permute.xlu0 %318
    %322 = vset.pattern.permute.xlu0 0
    %323 = vperm.xlu0 %322, %v289
    %v324 = vpop.permute.xlu0 %323
    %327 = vset.pattern.permute.xlu0 0
    %328 = vperm.xlu0 %327, %v290
    %v329 = vpop.permute.xlu0 %328
    %331 = vset.pattern.permute.xlu0 1
    %332 = vperm.xlu0 %331, %v283
    %v333 = vpop.permute.xlu0 %332
    %335 = vset.pattern.permute.xlu0 1
    %336 = vperm.xlu0 %335, %v284
    %v337 = vpop.permute.xlu0 %336
    %339 = vset.pattern.permute.xlu0 1
    %340 = vperm.xlu0 %339, %v285
    %v341 = vpop.permute.xlu0 %340
    %343 = vset.pattern.permute.xlu0 1
    %344 = vperm.xlu0 %343, %v286
    %v345 = vpop.permute.xlu0 %344
    %347 = vset.pattern.permute.xlu0 1
    %348 = vperm.xlu0 %347, %v287
    %v349 = vpop.permute.xlu0 %348
    %351 = vset.pattern.permute.xlu0 1
    %352 = vperm.xlu0 %351, %v288
    %v353 = vpop.permute.xlu0 %352
    %355 = vset.pattern.permute.xlu0 1
    %356 = vperm.xlu0 %355, %v289
    %v357 = vpop.permute.xlu0 %356
    %359 = vset.pattern.permute.xlu0 1
    %360 = vperm.xlu0 %359, %v290
    %v361 = vpop.permute.xlu0 %360
    %vm363 = vcmask 261120
    %v365 = vsel %vm363, %v31, 0
    %v368 = vsel %vm363, %v32, 0
    %v371 = vsel %vm363, %v33, 0
    %v374 = vsel %vm363, %v34, 0
    %v377 = vsel %vm363, %v35, 0
    %v380 = vsel %vm363, %v36, 0
    %v383 = vsel %vm363, %v37, 0
    %v386 = vsel %vm363, %v38, 0
    %388 = vmatprep.subr.mxu0 0.0
    %389 = vmatpush1.msra.mxu0 0.0
    %390 = vmatprep.subr.mxu0 0.0
    %391 = vmatpush1.msra.mxu0 0.0
    %392 = vmatprep.subr.mxu0 0.0
    %393 = vmatpush1.msra.mxu0 0.0
    %394 = vmatprep.subr.mxu0 0.0
    %395 = vmatpush1.msra.mxu0 0.0
    %396 = vmatprep.subr.mxu0 0.0
    %397 = vmatpush1.msra.mxu0 0.0
    %398 = vmatprep.subr.mxu0 0.0
    %399 = vmatpush1.msra.mxu0 0.0
    %400 = vmatprep.subr.mxu0 0.0
    %401 = vmatpush1.msra.mxu0 0.0
    %402 = vmatprep.subr.mxu0 0.0
    %403 = vmatpush1.msra.mxu0 0.0
    %404 = vmatprep.subr.mxu0 0.0
    %405 = vmatpush1.msra.mxu0 0.0
    %406 = vmatprep.subr.mxu0 0.0
    %407 = vmatpush1.msra.mxu0 0.0
    %408 = vmatprep.subr.mxu0 0.0
    %409 = vmatpush1.msra.mxu0 0.0
    %410 = vmatprep.subr.mxu0 0.0
    %411 = vmatpush1.msra.mxu0 0.0
    %412 = vmatprep.subr.mxu0 %v46
    %413 = vmatpush1.msra.mxu0 %v45
    %414 = vmatprep.subr.mxu0 %v44
    %415 = vmatpush1.msra.mxu0 %v43
    %416 = vmatprep.subr.mxu0 %v42
    %417 = vmatpush1.msra.mxu0 %v41
    %418 = vmatprep.subr.mxu0 %v40
    %419 = vmatpush1.msra.mxu0 %v39
    %420 = vmatprep.subr.mxu0 0.0
    %421 = vmatpush2.msra.mxu0 0.0
    %422 = vmatprep.subr.mxu0 0.0
    %423 = vmatpush2.msra.mxu0 0.0
    %424 = vmatprep.subr.mxu0 0.0
    %425 = vmatpush2.msra.mxu0 0.0
    %426 = vmatprep.subr.mxu0 0.0
    %427 = vmatpush2.msra.mxu0 0.0
    %428 = vmatprep.subr.mxu0 0.0
    %429 = vmatpush2.msra.mxu0 0.0
    %430 = vmatprep.subr.mxu0 0.0
    %431 = vmatpush2.msra.mxu0 0.0
    %432 = vmatprep.subr.mxu0 0.0
    %433 = vmatpush2.msra.mxu0 0.0
    %434 = vmatprep.subr.mxu0 0.0
    %435 = vmatpush2.msra.mxu0 0.0
    %436 = vmatprep.subr.mxu0 0.0
    %437 = vmatpush2.msra.mxu0 0.0
    %438 = vmatprep.subr.mxu0 0.0
    %439 = vmatpush2.msra.mxu0 0.0
    %440 = vmatprep.subr.mxu0 0.0
    %441 = vmatpush2.msra.mxu0 0.0
    %442 = vmatprep.subr.mxu0 0.0
    %443 = vmatpush2.msra.mxu0 0.0
    %444 = vmatprep.subr.mxu0 0.0
    %445 = vmatpush2.msra.mxu0 0.0
    %446 = vmatprep.subr.mxu0 0.0
    %447 = vmatpush2.msra.mxu0 0.0
    %448 = vmatprep.subr.mxu0 0.0
    %449 = vmatpush2.msra.mxu0 0.0
    %450 = vmatprep.subr.mxu0 0.0
    %451 = vmatpush2.msra.mxu0 0.0
    %452 = vmatprep.mubr.f32.mxu0 0.0
    %453 = vmatmul.mubr.f32.gmra.mxu0 %v365
    %v454 = vpop.f32.mrf.mxu0
    %v455 = vadd.f32 %v294, %v454
    %v456 = vpop.f32.mrf.mxu0
    %v457 = vadd.f32 %v333, %v456
    %458 = vmatprep.mubr.f32.mxu0 0.0
    %459 = vmatmul.mubr.f32.gmra.mxu0 %v368
    %v460 = vpop.f32.mrf.mxu0
    %v461 = vadd.f32 %v299, %v460
    %v462 = vpop.f32.mrf.mxu0
    %v463 = vadd.f32 %v337, %v462
    %464 = vmatprep.mubr.f32.mxu0 0.0
    %465 = vmatmul.mubr.f32.gmra.mxu0 %v371
    %v466 = vpop.f32.mrf.mxu0
    %v467 = vadd.f32 %v304, %v466
    %v468 = vpop.f32.mrf.mxu0
    %v469 = vadd.f32 %v341, %v468
    %470 = vmatprep.mubr.f32.mxu0 0.0
    %471 = vmatmul.mubr.f32.gmra.mxu0 %v374
    %v472 = vpop.f32.mrf.mxu0
    %v473 = vadd.f32 %v309, %v472
    %v474 = vpop.f32.mrf.mxu0
    %v475 = vadd.f32 %v345, %v474
    %476 = vmatprep.mubr.f32.mxu0 0.0
    %477 = vmatmul.mubr.f32.gmra.mxu0 %v377
    %v478 = vpop.f32.mrf.mxu0
    %v479 = vadd.f32 %v314, %v478
    %v480 = vpop.f32.mrf.mxu0
    %v481 = vadd.f32 %v349, %v480
    %482 = vmatprep.mubr.f32.mxu0 0.0
    %483 = vmatmul.mubr.f32.gmra.mxu0 %v380
    %v484 = vpop.f32.mrf.mxu0
    %v485 = vadd.f32 %v319, %v484
    %v486 = vpop.f32.mrf.mxu0
    %v487 = vadd.f32 %v353, %v486
    %488 = vmatprep.mubr.f32.mxu0 0.0
    %489 = vmatmul.mubr.f32.gmra.mxu0 %v383
    %v490 = vpop.f32.mrf.mxu0
    %v491 = vadd.f32 %v324, %v490
    %v492 = vpop.f32.mrf.mxu0
    %v493 = vadd.f32 %v357, %v492
    %494 = vmatprep.mubr.f32.mxu0 0.0
    %495 = vmatmul.mubr.f32.gmra.mxu0 %v386
    %v496 = vpop.f32.mrf.mxu0
    %v497 = vadd.f32 %v329, %v496
    %v498 = vpop.f32.mrf.mxu0
    %v499 = vadd.f32 %v361, %v498
    %500 = vdwg.mxu0
    %v501 = vtanh.pop %v455
    %v502 = vtanh.pop %v457
    %v503 = vtanh.pop %v461
    %v504 = vtanh.pop %v463
    %v505 = vtanh.pop %v467
    %v506 = vtanh.pop %v469
    %v507 = vtanh.pop %v473
    %v508 = vtanh.pop %v475
    %v509 = vtanh.pop %v479
    %v510 = vtanh.pop %v481
    %v511 = vtanh.pop %v485
    %v512 = vtanh.pop %v487
    %v513 = vtanh.pop %v491
    %v514 = vtanh.pop %v493
    %v515 = vtanh.pop %v497
    %v516 = vtanh.pop %v499
    %v517 = vld [vmem:[%s6] sm:$0x1]
    %s518 = sld [smem:[#allocation2]]
    %v519 = vstv %s518
    %vm520 = vcmask 523264
    %v522 = vsel %vm520, %v517, 0
    %524 = vmatprep.subr.mxu0 0.0
    %525 = vmatpush1.msra.mxu0 0.0
    %526 = vmatprep.subr.mxu0 0.0
    %527 = vmatpush1.msra.mxu0 0.0
    %528 = vmatprep.subr.mxu0 0.0
    %529 = vmatpush1.msra.mxu0 0.0
    %530 = vmatprep.subr.mxu0 0.0
    %531 = vmatpush1.msra.mxu0 0.0
    %532 = vmatprep.subr.mxu0 0.0
    %533 = vmatpush1.msra.mxu0 0.0
    %534 = vmatprep.subr.mxu0 0.0
    %535 = vmatpush1.msra.mxu0 0.0
    %536 = vmatprep.subr.mxu0 0.0
    %537 = vmatpush1.msra.mxu0 0.0
    %538 = vmatprep.subr.mxu0 0.0
    %539 = vmatpush1.msra.mxu0 0.0
    %540 = vmatprep.subr.mxu0 %v516
    %541 = vmatpush1.msra.mxu0 %v515
    %542 = vmatprep.subr.mxu0 %v514
    %543 = vmatpush1.msra.mxu0 %v513
    %544 = vmatprep.subr.mxu0 %v512
    %545 = vmatpush1.msra.mxu0 %v511
    %546 = vmatprep.subr.mxu0 %v510
    %547 = vmatpush1.msra.mxu0 %v509
    %548 = vmatprep.subr.mxu0 %v508
    %549 = vmatpush1.msra.mxu0 %v507
    %550 = vmatprep.subr.mxu0 %v506
    %551 = vmatpush1.msra.mxu0 %v505
    %552 = vmatprep.subr.mxu0 %v504
    %553 = vmatpush1.msra.mxu0 %v503
    %554 = vmatprep.subr.mxu0 %v502
    %555 = vmatpush1.msra.mxu0 %v501
    %556 = vmatprep.subr.mxu0 0.0
    %557 = vmatpush2.msra.mxu0 0.0
    %558 = vmatprep.subr.mxu0 0.0
    %559 = vmatpush2.msra.mxu0 0.0
    %560 = vmatprep.subr.mxu0 0.0
    %561 = vmatpush2.msra.mxu0 0.0
    %562 = vmatprep.subr.mxu0 0.0
    %563 = vmatpush2.msra.mxu0 0.0
    %564 = vmatprep.subr.mxu0 0.0
    %565 = vmatpush2.msra.mxu0 0.0
    %566 = vmatprep.subr.mxu0 0.0
    %567 = vmatpush2.msra.mxu0 0.0
    %568 = vmatprep.subr.mxu0 0.0
    %569 = vmatpush2.msra.mxu0 0.0
    %570 = vmatprep.subr.mxu0 0.0
    %571 = vmatpush2.msra.mxu0 0.0
    %572 = vmatprep.subr.mxu0 0.0
    %573 = vmatpush2.msra.mxu0 0.0
    %574 = vmatprep.subr.mxu0 0.0
    %575 = vmatpush2.msra.mxu0 0.0
    %576 = vmatprep.subr.mxu0 0.0
    %577 = vmatpush2.msra.mxu0 0.0
    %578 = vmatprep.subr.mxu0 0.0
    %579 = vmatpush2.msra.mxu0 0.0
    %580 = vmatprep.subr.mxu0 0.0
    %581 = vmatpush2.msra.mxu0 0.0
    %582 = vmatprep.subr.mxu0 0.0
    %583 = vmatpush2.msra.mxu0 0.0
    %584 = vmatprep.subr.mxu0 0.0
    %585 = vmatpush2.msra.mxu0 0.0
    %586 = vmatprep.subr.mxu0 0.0
    %587 = vmatpush2.msra.mxu0 0.0
    %588 = vmatprep.mubr.f32.mxu0 0.0
    %589 = vmatmul.mubr.f32.gmra.mxu0 %v522
    %v590 = vpop.f32.mrf.mxu0
    %v591 = vadd.f32 %v519, %v590
    %v592 = vpop.f32.mrf.mxu0
    %v593 = vadd.f32 %v519, %v592
    %594 = vdwg.mxu0
    %vm595 = vcmask 1040384
    %v596 = vsel %vm595, %v591, -inf
    %597 = vmax.xlane.f32.xlu0 %v596
    %v598 = vpop.xlane.xlu0 %597
    %v599 = vsub.f32 %v591, %v598
    %v600 = vmul.f32 %v599, 1.442695
    %v601 = vpow.pop %v600
    %v602 = vsel %vm595, %v601, 0.0
    %603 = vadd.xlane.f32.xlu0 %v602
    %v604 = vpop.xlane.xlu0 %603
    %v605 = vrcp.pop %v604
    %v606 = vmul.f32 %v604, %v605
    %v607 = vsub.f32 2.0, %v606
    %v608 = vmul.f32 %v605, %v607
    %v609 = vmul.f32 %v601, %v608
    %610 = vst [vmem:[#allocation3] sm:$0x1] %v609
    %v611 = vsel %vm595, %v593, -inf
    %612 = vmax.xlane.f32.xlu0 %v611
    %v613 = vpop.xlane.xlu0 %612
    %v614 = vsub.f32 %v593, %v613
    %v615 = vmul.f32 %v614, 1.442695
    %v616 = vpow.pop %v615
    %v617 = vsel %vm595, %v616, 0.0
    %618 = vadd.xlane.f32.xlu0 %v617
    %v619 = vpop.xlane.xlu0 %618
    %v620 = vrcp.pop %v619
    %v621 = vmul.f32 %v619, %v620
    %v622 = vsub.f32 2.0, %v621
    %v623 = vmul.f32 %v620, %v622
    %v624 = vmul.f32 %v616, %v623
    %625 = vst [vmem:[#allocation3 + $0x1] sm:$0x1] %v624
    // Predicated region
    $region34: #{attention_pallas.1} parent=1 // pred_check
      _
    $region35: #{attention_pallas.1} parent=1 // pred_check_branch
      %627 = sbr.rel (0) target = $region37
    $region36: #{attention_pallas.1} parent=1 // pred_region
      %s629 = ssub.s32 32, 32
      %630 = vsyncadd [#allocation4], %s629
      %s632 = sshll.u32 [#allocation3], 4
      %s633 = int_to_ptr.vmem [resolvable:$true] %s632
      %635 = dma.vmem_to_hbm [thread:$0]  %s633, 32, %s8, [#allocation4]
    $region37: #{attention_pallas.1} parent=1 // pred_fallthru
      _
    // Predicated region
    $region38: #{attention_pallas.1} parent=1 // pred_check
      _
    $region39: #{attention_pallas.1} parent=1 // pred_check_branch
      %637 = sbr.rel (0) target = $region41
    $region40: #{attention_pallas.1} parent=1 // pred_region
      %638 = dma.done [#allocation4], 32
    $region41: #{attention_pallas.1} parent=1 // pred_fallthru
      _
    %639 = vsyncpa [#allocation4], 1

</llo_original>
